<compile_context>
chip_gen: v5e
topology: v5e:2x2
jax: 0.10.0
libtpu: 0.0.40
codegen_flags: <defaults>
</compile_context>

<pallas_src>
import functools

import jax
import jax.numpy as jnp
from jax.experimental import pallas as pl
from jax.experimental.pallas import tpu as pltpu


def _round_up(x, m):
    return (x + m - 1) // m * m


def _cdiv(a, b):
    return (a + b - 1) // b


def _loss_kernel(logits_ref, target_ref, out_ref, *, mode, classes, smoothing):
    """Per-row loss for one batch tile. mode in {'ce', 'ls', 'sls'}."""
    x = logits_ref[...].astype(jnp.float32)          # (TB, C)
    tgt = target_ref[...]                             # (TB, 1) int32
    TB, C = x.shape

    # Numerically stable log-softmax pieces.  All reductions are per-row
    # (axis=-1), so unspecified rows of a ragged last block stay isolated.
    m = jnp.max(x, axis=-1, keepdims=True)
    z = x - m                                          # max(z) == 0 per row
    ez = jnp.exp(z)                                    # only full-tile exp
    sumexp = jnp.sum(ez, axis=-1, keepdims=True)       # (TB, 1)
    lse = jnp.log(sumexp)                              # (TB, 1)

    # z at the target lane via iota-compare (no scatter / float one-hot).
    cols = jax.lax.broadcasted_iota(jnp.int32, (TB, C), 1)
    is_tgt = cols == tgt                               # (TB, C) bool
    z_t = jnp.sum(jnp.where(is_tgt, z, 0.0), axis=-1, keepdims=True)

    off = smoothing / (classes - 1)
    confidence = 1.0 - smoothing
    nll = lse - z_t                                    # -log softmax[target]

    if mode == "ce":
        # nn.CrossEntropyLoss per-row NLL.
        per_row = nll
    else:
        # sum(-true_dist * logp) without materializing logp / true_dist:
        #   = off * (C*lse - sum(z)) + (confidence - off) * nll
        if smoothing:
            sum_z = jnp.sum(z, axis=-1, keepdims=True)
            base = off * (C * lse - sum_z) + (confidence - off) * nll
        else:                                          # off == 0, conf == 1
            base = nll

        if mode == "ls":
            per_row = base
        else:  # 'sls' (target=False branch, as constructed by OverHaulLoss)
            inv = 1.0 / sumexp        # == max(softmax), since max(exp(z)) == 1
            if smoothing:
                # sum(probs * (-true_dist * logp)) decomposed:
                #   sum(probs*logp) = inv*sum(ez*z) - lse   (sum(probs) == 1)
                sum_ez_z = jnp.sum(ez * z, axis=-1, keepdims=True)
                p_t = jnp.exp(z_t) * inv
                logp_t = z_t - lse
                extra = (-off * (inv * sum_ez_z - lse)
                         - (confidence - off) * p_t * logp_t)
                per_row = (base + extra) * (1.0 + inv)
            else:
                per_row = base * (1.0 + inv)

    out_ref[...] = per_row


_TARGET_BLOCK_BYTES = 2 << 20   # ~2 MiB of f32 rows per grid step


def _make_loss_fn(mode, classes, smoothing):
    kernel = functools.partial(
        _loss_kernel, mode=mode, classes=classes, smoothing=smoothing
    )

    def fn(logits, target):
        B, C = logits.shape
        itemsize = jnp.dtype(logits.dtype).itemsize

        # Byte-budgeted batch tile (multiple of 8).  ~2 MiB of f32 working
        # rows per step hides the ~0.35us/step overhead behind the HBM DMA on
        # v5e/v6e/v7x while keeping VMEM usage modest on every generation.
        tile_b = max(8, (_TARGET_BLOCK_BYTES // (C * 4)) // 8 * 8)
        # Never tile past the (8-rounded) batch; NO wrapper-side padding.
        tile_b = min(tile_b, _round_up(B, 8))
        n_tiles = _cdiv(B, tile_b)
        # v7x megacore: give the "parallel" grid axis >= 2 steps when the
        # batch allows it, so both TensorCores get work.
        if n_tiles == 1 and B >= 16:
            tile_b = _round_up(_cdiv(B, 2), 8)
            n_tiles = _cdiv(B, tile_b)

        t2d = target.astype(jnp.int32).reshape(B, 1)

        # Scoped-VMEM budget: double-buffered blocks + generous headroom for
        # the f32 tile temporaries.  v5e's default scoped limit is 16 MiB;
        # cap well below v7x's 64 MiB physical VMEM.
        in_block = tile_b * C * itemsize
        vmem_limit = (2 * (in_block + 2 * tile_b * 4)
                      + 10 * tile_b * C * 4
                      + (2 << 20))
        vmem_limit = max(16 << 20, min(int(vmem_limit), 56 << 20))

        cost = pl.CostEstimate(
            flops=8 * B * C,
            transcendentals=B * C,
            bytes_accessed=B * C * itemsize + B * 4 + B * 4,
        )

        per_row = pl.pallas_call(
            kernel,
            out_shape=jax.ShapeDtypeStruct((B, 1), jnp.float32),
            grid_spec=pltpu.PrefetchScalarGridSpec(
                num_scalar_prefetch=0,
                grid=(n_tiles,),
                in_specs=[
                    pl.BlockSpec((tile_b, C), lambda i: (i, 0)),
                    pl.BlockSpec((tile_b, 1), lambda i: (i, 0)),
                ],
                out_specs=pl.BlockSpec((tile_b, 1), lambda i: (i, 0)),
            ),
            compiler_params=pltpu.CompilerParams(
                dimension_semantics=("parallel",),
                vmem_limit_bytes=vmem_limit,
            ),
            cost_estimate=cost,
        )(logits, t2d)

        # Mean over the real batch.  The output array is exactly (B, 1); any
        # rows of the ragged last block past B are dropped by Pallas on
        # writeback, so no masking/slicing is needed here.
        return jnp.sum(per_row) / B

    return jax.jit(fn)


class OverHaulLoss:
    """JAX/Pallas port of train_tools.criterion.OverHaulLoss (forward only)."""

    def __init__(self, soft_label_smoothing=False, label_smoothing=False,
                 classes=100, smoothing=0.0):
        if soft_label_smoothing:
            mode = "sls"
        elif label_smoothing:
            mode = "ls"
        else:
            mode = "ce"
        self._fn = _make_loss_fn(mode, classes, smoothing)

    def __call__(self, output, target):
        # PyTorch: `if len(output) == 2: output = output[0]` — intended for
        # (logits, features) tuple outputs.
        if isinstance(output, (tuple, list)) and len(output) == 2:
            output = output[0]
        # TODO(synk): PyTorch's len() check also fires on a plain tensor with
        # batch == 2 (which then breaks downstream); that shape bug is not
        # replicated — use batch != 2 or tuple inputs.
        return self._fn(output, target)


def _ref_loss(mode, classes, smoothing, logits, target):
    """Plain-JAX reference mirroring the PyTorch math, for verification."""
    x = logits.astype(jnp.float32)
    logp = jax.nn.log_softmax(x, axis=-1)
    onehot = jax.nn.one_hot(target, classes, dtype=jnp.float32)
    off = smoothing / (classes - 1)
    td = off + ((1.0 - smoothing) - off) * onehot
    if mode == "ce":
        return jnp.mean(-jnp.sum(onehot * logp, axis=-1))
    if mode == "ls":
        return jnp.mean(jnp.sum(-td * logp, axis=-1))
    probs = jax.nn.softmax(x, axis=-1)
    mx = jnp.max(probs, axis=-1)
    if smoothing:
        l = jnp.sum((1.0 + probs) * (-td * logp), axis=-1)
    else:
        l = jnp.sum(-td * logp, axis=-1)
    return jnp.mean(l * (1.0 + mx))


if __name__ == "__main__":
    C = 100  # classes=100 matches the module default
    key = jax.random.PRNGKey(0)

    configs = [
        # (soft_label_smoothing, label_smoothing, smoothing, mode_name)
        (False, False, 0.0, "ce"),
        (False, True, 0.1, "ls"),
        (True, False, 0.1, "sls"),
        (True, False, 0.0, "sls"),
    ]
    # B=8 : exact single tile.
    # B=10: ragged single tile (OOB read/drop-write path).
    # B=300: megacore split -> 2 tiles, ragged last tile.
    # (8, bf16): dtype pass-through (bf16 stays bf16 in HBM).
    cases = [(8, jnp.float32), (10, jnp.float32), (300, jnp.float32),
             (8, jnp.bfloat16)]
    for B, dtype in cases:
        k1, k2, key = jax.random.split(key, 3)
        logits = jax.random.normal(k1, (B, C), dtype=jnp.float32).astype(dtype)
        target = jax.random.randint(k2, (B,), 0, C, dtype=jnp.int32)
        for sls_flag, ls_flag, sm, mode in configs:
            crit = OverHaulLoss(soft_label_smoothing=sls_flag,
                                label_smoothing=ls_flag,
                                classes=C, smoothing=sm)
            loss = crit(logits, target)
            loss = jax.block_until_ready(loss)
            ref = _ref_loss(mode, C, sm, logits, target)
            assert jnp.allclose(loss, ref, rtol=1e-4, atol=1e-5), \
                (B, str(dtype), mode, sm, float(loss), float(ref))

    print("KERNEL_OK")
</pallas_src>

<mosaic_0001>
module attributes {stable_mosaic.version = 11 : i64} {
  func.func @_loss_kernel(%arg0: i32, %arg1: memref<8x100xf32, #tpu.memory_space<vmem>>, %arg2: memref<8x1xi32, #tpu.memory_space<vmem>>, %arg3: memref<8x1xf32, #tpu.memory_space<vmem>>) attributes {dimension_semantics = [#tpu.dimension_semantics<parallel>], iteration_bounds = array<i64: 1>, scalar_prefetch = 0 : i64, scratch_operands = 0 : i64, tpu.core_type = #tpu.core_type<tc>, window_params = [{transform_indices = @transform_0, window_bounds = array<i64: 8, 100>}, {transform_indices = @transform_1, window_bounds = array<i64: 8, 1>}, {transform_indices = @transform_2, window_bounds = array<i64: 8, 1>}]} {
    %c0 = arith.constant 0 : index
    %c0_0 = arith.constant 0 : index
    %0 = vector.load %arg1[%c0, %c0_0] : memref<8x100xf32, #tpu.memory_space<vmem>>, vector<8x100xf32>
    %c0_1 = arith.constant 0 : index
    %c0_2 = arith.constant 0 : index
    %1 = vector.load %arg2[%c0_1, %c0_2] : memref<8x1xi32, #tpu.memory_space<vmem>>, vector<8x1xi32>
    %cst = arith.constant dense<0xFF800000> : vector<8xf32>
    %2 = vector.multi_reduction <maximumf>, %0, %cst [1] : vector<8x100xf32> to vector<8xf32>
    %3 = vector.shape_cast %2 : vector<8xf32> to vector<8x1xf32>
    %4 = vector.broadcast %3 : vector<8x1xf32> to vector<8x100xf32>
    %5 = arith.subf %0, %4 : vector<8x100xf32>
    %6 = math.exp %5 : vector<8x100xf32>
    %cst_3 = arith.constant dense<0.000000e+00> : vector<8xf32>
    %7 = vector.multi_reduction <add>, %6, %cst_3 [1] : vector<8x100xf32> to vector<8xf32>
    %8 = vector.shape_cast %7 : vector<8xf32> to vector<8x1xf32>
    %9 = math.log %8 : vector<8x1xf32>
    %10 = tpu.iota {dimensions = array<i32: 1>} : vector<8x100xi32>
    %11 = vector.broadcast %1 : vector<8x1xi32> to vector<8x100xi32>
    %12 = arith.cmpi eq, %10, %11 : vector<8x100xi32>
    %cst_4 = arith.constant 0.000000e+00 : f32
    %13 = vector.broadcast %cst_4 : f32 to vector<8x100xf32>
    %14 = arith.select %12, %5, %13 : vector<8x100xi1>, vector<8x100xf32>
    %cst_5 = arith.constant dense<0.000000e+00> : vector<8xf32>
    %15 = vector.multi_reduction <add>, %14, %cst_5 [1] : vector<8x100xf32> to vector<8xf32>
    %16 = vector.shape_cast %15 : vector<8xf32> to vector<8x1xf32>
    %17 = arith.subf %9, %16 : vector<8x1xf32>
    %c0_6 = arith.constant 0 : index
    %c0_7 = arith.constant 0 : index
    %18 = vector.load %arg3[%c0_6, %c0_7] : memref<8x1xf32, #tpu.memory_space<vmem>>, vector<8x1xf32>
    tpu.vector_store %arg3[%c0_6, %c0_7], %17 {strides = array<i32>} : memref<8x1xf32, #tpu.memory_space<vmem>>, vector<8x1xf32>,
    return
  }
  func.func @transform_0(%arg0: i32) -> (i32, i32) {
    %c0_i32 = arith.constant 0 : i32
    %c0_i32_0 = arith.constant 0 : i32
    return %arg0, %c0_i32 : i32, i32
  }
  func.func @transform_1(%arg0: i32) -> (i32, i32) {
    %c0_i32 = arith.constant 0 : i32
    %c0_i32_0 = arith.constant 0 : i32
    return %arg0, %c0_i32 : i32, i32
  }
  func.func @transform_2(%arg0: i32) -> (i32, i32) {
    %c0_i32 = arith.constant 0 : i32
    %c0_i32_0 = arith.constant 0 : i32
    return %arg0, %c0_i32 : i32, i32
  }
}

</mosaic_0001>

<llo_original>
// kernel: fn.1
$region0: #{fn.1}
  #allocation0 [shape = 'u32[]', space=smem, size = 0x4, offset = 0x4, fixed_abs, tag = 'smem constant byte address 0x4 - core index']
  #allocation1 [shape = 'u32[72,128]{1,0:T(1,128)}', space=vmem, size = 0x9000, scoped, tag = 'internal scratch']
  %s0 = inlined_call_operand.vmem [shape: f32[8,100], index: 0, kind: input, shape index: {}]
  %s1 = inlined_call_operand.vmem [shape: s32[8,1], index: 1, kind: input, shape index: {}]
  %s2 = inlined_call_operand.vmem [shape: f32[8,1], index: 2, kind: output, shape index: {}]
  %s3 = sld [smem:[#allocation0]]
  $region18: #{fn.1} parent=0
    _
  %s5 = ssub.s32 1, %s3
  %s6 = scalar_select 0, %s5, %s3
  // Predicated region
  $region2: #{fn.1} parent=0 // pred_check
    _
  $region3: #{fn.1} parent=0 // pred_check_branch
    %8 = sbr.rel (0) target = $region5
  $region4: #{fn.1} parent=0 // pred_region
    _
  $region5: #{fn.1} parent=0 // pred_fallthru
    _
  // Predicated region
  $region6: #{fn.1} parent=0 // pred_check
    _
  $region7: #{fn.1} parent=0 // pred_check_branch
    %10 = sbr.rel (0) target = $region9
  $region8: #{fn.1} parent=0 // pred_region
    _
  $region9: #{fn.1} parent=0 // pred_fallthru
    _
  %v11 = vld [vmem:[%s0] sm:$0xff]
  %v12 = vld [vmem:[%s1] sm:$0xff]
  %vm13 = vcmask 818176
  %v14 = vsel %vm13, %v11, -inf
  %15 = vmax.xlane.f32.xlu0 %v14
  %v16 = vpop.xlane.xlu0 %15
  %v17 = vsub.f32 %v11, %v16
  %v18 = vmul.f32 %v17, 1.442695
  %v19 = vpow.pop %v18
  %v20 = vsel %vm13, %v19, 0.0
  %21 = vadd.xlane.f32.xlu0 %v20
  %v22 = vpop.xlane.xlu0 %21
  %v23 = vlog2.pop %v22
  %v24 = vmul.f32 %v23, 0.6931472
  %v25 = vlaneseq
  %v26 = vand.u32 %v25, 127
  %27 = vset.pattern.permute.xlu0 0
  %28 = vperm.xlu0 %27, %v12
  %v29 = vpop.permute.xlu0 %28
  %vm30 = vcmp.eq.s32.totalorder %v26, %v29
  %v31 = vsel %vm30, %v17, 0.0
  %v32 = vsel %vm13, %v31, 0.0
  %33 = vadd.xlane.f32.xlu0 %v32
  %v34 = vpop.xlane.xlu0 %33
  %v35 = vsub.f32 %v24, %v34
  %vm36 = vcmask 7168
  %37 = vst.msk [vmem:[%s2] sm:$0xff] %vm36, %v35
  // Predicated region
  $region10: #{fn.1} parent=0 // pred_check
    _
  $region11: #{fn.1} parent=0 // pred_check_branch
    %39 = sbr.rel (0) target = $region13
  $region12: #{fn.1} parent=0 // pred_region
    _
  $region13: #{fn.1} parent=0 // pred_fallthru
    _
  // Predicated region
  $region14: #{fn.1} parent=0 // pred_check
    _
  $region15: #{fn.1} parent=0 // pred_check_branch
    %41 = sbr.rel (0) target = $region17
  $region16: #{fn.1} parent=0 // pred_region
    _
  $region17: #{fn.1} parent=0 // pred_fallthru
    _

</llo_original>
